<compile_context>
chip_gen: v6e
topology: v6e:2x2x1
jax: 0.10.0
libtpu: 0.0.40
codegen_flags: <defaults>
</compile_context>

<pallas_src>
import math
from functools import partial

import jax
import jax.numpy as jnp
from jax.experimental import pallas as pl
from jax.experimental.pallas import tpu as pltpu


def _round_up(n, m):
    return ((n + m - 1) // m) * m


def _nbytes(a):
    return int(math.prod(a.shape)) * jnp.dtype(a.dtype).itemsize


# ---------------------------------------------------------------------------
# Kernel
# ---------------------------------------------------------------------------
def gru_cell_kernel(
    x_ref, h_ref,
    whzr_ref,           # (Hp, 2*Hp)  fused [Whz | Whr], zero-padded
    wx_ref, bx_ref,     # (I, 3*Hp), (1, 3*Hp)  fused [Wxz | Wxr | Wxh] + [bz | br | bh]
    whh_ref,            # (Hp, Hp)
    wproj_ref, bproj_ref,  # (Hp, Op), (1, Op)
    y_ref, hn_ref,      # (bm, Op), (bm, Hp)  lane-dense (128-multiple) stores
):
    Hp = h_ref.shape[1]
    f32 = jnp.float32
    mmdt = whzr_ref.dtype  # matmul dtype (f32 or bf16); gating math stays f32

    h = h_ref[...].astype(f32)
    x_mm = x_ref[...].astype(mmdt)
    h_mm = h.astype(mmdt)

    # Fused x-side matmul: (bm, I) @ (I, 3*Hp) -> [xz | xr | xh] + [bz | br | bh]
    gx = jnp.dot(x_mm, wx_ref[...], preferred_element_type=f32) + bx_ref[...]
    # Fused h-side matmul for z, r: (bm, Hp) @ (Hp, 2*Hp) -> [hz | hr]
    gh = jnp.dot(h_mm, whzr_ref[...], preferred_element_type=f32)

    # All slices below are at 128-aligned lane offsets (Hp is a multiple of 128).
    z = jax.nn.sigmoid(gh[:, :Hp] + gx[:, :Hp])
    r = jax.nn.sigmoid(gh[:, Hp:] + gx[:, Hp:2 * Hp])

    # Candidate: r applied BEFORE the hidden matmul (module semantics).
    rh = (r * h).astype(mmdt)
    hc = jnp.tanh(jnp.dot(rh, whh_ref[...], preferred_element_type=f32) + gx[:, 2 * Hp:])

    # hn = (1 - z) * h + z * hc  ==  h + z * (hc - h)
    hn = h + z * (hc - h)

    # Output projection (weights padded to a 128-multiple lane width).
    y = jnp.dot(hn.astype(mmdt), wproj_ref[...], preferred_element_type=f32) + bproj_ref[...]

    y_ref[...] = y.astype(y_ref.dtype)
    hn_ref[...] = hn.astype(hn_ref.dtype)


# ---------------------------------------------------------------------------
# One-time parameter packing (do NOT call per step)
# ---------------------------------------------------------------------------
def pack_params(params, matmul_dtype=None):
    """Pack torch-layout (out, in) params into fused, lane-padded (in, out) matrices.

    Returns (packed_dict, dims) where dims = (input_size, hidden_size, out_size).
    """
    hidden = params["Whz"].shape[0]
    in_size = params["Wxz"].shape[1]
    out_size = params["W_proj"].shape[0]
    Hp = _round_up(hidden, 128)
    Op = _round_up(out_size, 128)
    wdt = jnp.dtype(matmul_dtype) if matmul_dtype is not None else jnp.dtype(params["Whz"].dtype)
    f32 = jnp.float32

    whzr = jnp.zeros((Hp, 2 * Hp), wdt)
    whzr = whzr.at[:hidden, :hidden].set(params["Whz"].T.astype(wdt))
    whzr = whzr.at[:hidden, Hp:Hp + hidden].set(params["Whr"].T.astype(wdt))

    wx = jnp.zeros((in_size, 3 * Hp), wdt)
    wx = wx.at[:, :hidden].set(params["Wxz"].T.astype(wdt))
    wx = wx.at[:, Hp:Hp + hidden].set(params["Wxr"].T.astype(wdt))
    wx = wx.at[:, 2 * Hp:2 * Hp + hidden].set(params["Wxh"].T.astype(wdt))

    bx = jnp.zeros((1, 3 * Hp), f32)
    bx = bx.at[0, :hidden].set(params["bz"].astype(f32))
    bx = bx.at[0, Hp:Hp + hidden].set(params["br"].astype(f32))
    bx = bx.at[0, 2 * Hp:2 * Hp + hidden].set(params["bh"].astype(f32))

    whh = jnp.zeros((Hp, Hp), wdt).at[:hidden, :hidden].set(params["Whh"].T.astype(wdt))
    wproj = jnp.zeros((Hp, Op), wdt).at[:hidden, :out_size].set(params["W_proj"].T.astype(wdt))
    bproj = jnp.zeros((1, Op), f32).at[0, :out_size].set(params["b_proj"].astype(f32))

    packed = dict(whzr=whzr, wx=wx, bx=bx, whh=whh, wproj=wproj, bproj=bproj)
    return packed, (in_size, hidden, out_size)


# ---------------------------------------------------------------------------
# Forward wrapper
# ---------------------------------------------------------------------------
@partial(jax.jit, static_argnames=("dims", "batch_block"))
def gru_cell_forward(x, h, packed, *, dims, batch_block=None):
    """x: (B, I), h: (B, H) or (B, Hp) or None -> (y: (B, O), hn: (B, H))."""
    in_size, hidden, out_size = dims
    B = x.shape[0]
    Hp = packed["whh"].shape[0]
    Op = packed["wproj"].shape[1]

    if h is None:
        h_pad = jnp.zeros((B, Hp), dtype=x.dtype)
    elif h.shape[1] == Hp:
        h_pad = h  # already padded (e.g. carried from a previous step)
    else:
        h_pad = jnp.pad(h, ((0, 0), (0, Hp - h.shape[1])))

    # Batch tiling (lets v7x's two TensorCores split the batch via "parallel").
    bm = B if batch_block is None else batch_block
    if B % bm != 0 or (bm != B and bm % 8 != 0):
        bm = B
    grid = (B // bm,)

    def full(arr):
        return pl.BlockSpec(arr.shape, lambda i: (0, 0))

    def batched(width):
        return pl.BlockSpec((bm, width), lambda i: (i, 0))

    flops = 2 * B * (Hp * 2 * Hp + in_size * 3 * Hp + Hp * Hp + Hp * Op)
    transcendentals = 3 * B * Hp
    bytes_accessed = int(
        sum(_nbytes(a) for a in (x, h_pad, *packed.values()))
        + B * (Op + Hp) * jnp.dtype(x.dtype).itemsize
    )

    y_pad, hn_pad = pl.pallas_call(
        gru_cell_kernel,
        out_shape=(
            jax.ShapeDtypeStruct((B, Op), x.dtype),
            jax.ShapeDtypeStruct((B, Hp), x.dtype),
        ),
        grid=grid,
        in_specs=[
            batched(in_size), batched(Hp),
            full(packed["whzr"]), full(packed["wx"]), full(packed["bx"]),
            full(packed["whh"]), full(packed["wproj"]), full(packed["bproj"]),
        ],
        out_specs=(batched(Op), batched(Hp)),
        compiler_params=pltpu.CompilerParams(dimension_semantics=("parallel",)),
        cost_estimate=pl.CostEstimate(
            flops=flops, transcendentals=transcendentals, bytes_accessed=bytes_accessed
        ),
    )(x, h_pad, packed["whzr"], packed["wx"], packed["bx"],
      packed["whh"], packed["wproj"], packed["bproj"])

    return y_pad[:, :out_size], hn_pad[:, :hidden]


# ---------------------------------------------------------------------------
# Init + pure-JAX reference (mirrors the PyTorch module exactly)
# ---------------------------------------------------------------------------
def init_params(key, input_size, hidden_size, out_size, dtype=jnp.float32):
    ks = jax.random.split(key, 11)

    def u(k, shape, fan_in):
        bound = 1.0 / jnp.sqrt(fan_in)
        return jax.random.uniform(k, shape, dtype=dtype, minval=-bound, maxval=bound)

    return {
        "Whz": u(ks[0], (hidden_size, hidden_size), hidden_size),
        "Wxz": u(ks[1], (hidden_size, input_size), input_size),
        "bz": u(ks[2], (hidden_size,), input_size),
        "Whr": u(ks[3], (hidden_size, hidden_size), hidden_size),
        "Wxr": u(ks[4], (hidden_size, input_size), input_size),
        "br": u(ks[5], (hidden_size,), input_size),
        "Whh": u(ks[6], (hidden_size, hidden_size), hidden_size),
        "Wxh": u(ks[7], (hidden_size, input_size), input_size),
        "bh": u(ks[8], (hidden_size,), input_size),
        "W_proj": u(ks[9], (out_size, hidden_size), hidden_size),
        "b_proj": u(ks[10], (out_size,), hidden_size),
    }


def gru_cell_ref(x, h, params):
    lin = lambda v, W, b=None: v @ W.T + (b if b is not None else 0.0)
    z = jax.nn.sigmoid(lin(h, params["Whz"]) + lin(x, params["Wxz"], params["bz"]))
    r = jax.nn.sigmoid(lin(h, params["Whr"]) + lin(x, params["Wxr"], params["br"]))
    hc = jnp.tanh(lin(r * h, params["Whh"]) + lin(x, params["Wxh"], params["bh"]))
    hn = (1.0 - z) * h + z * hc
    y = lin(hn, params["W_proj"], params["b_proj"])
    return y, hn


if __name__ == "__main__":
    B, INPUT, HIDDEN, OUT = 8, 16, 32, 8
    key = jax.random.PRNGKey(0)
    kx, kp, kh, kx2 = jax.random.split(key, 4)

    params = init_params(kp, INPUT, HIDDEN, OUT)

    # --- 1) f32 weights, h = zeros (module default when h is None) ---------
    x = jax.random.normal(kx, (B, INPUT), dtype=jnp.float32)
    h = jnp.zeros((B, HIDDEN), dtype=jnp.float32)
    packed_f32, dims = pack_params(params)

    y, hn = gru_cell_forward(x, h, packed_f32, dims=dims)
    jax.block_until_ready((y, hn))
    y_ref, hn_ref = gru_cell_ref(x, h, params)
    assert y.shape == (B, OUT) and hn.shape == (B, HIDDEN)
    assert jnp.allclose(y, y_ref, atol=1e-5, rtol=1e-5)
    assert jnp.allclose(hn, hn_ref, atol=1e-5, rtol=1e-5)

    # --- 2) f32 weights, non-zero h, batch split across a "parallel" grid --
    B2 = 16
    x2 = jax.random.normal(kx2, (B2, INPUT), dtype=jnp.float32)
    h2 = 0.1 * jax.random.normal(kh, (B2, HIDDEN), dtype=jnp.float32)
    y2, hn2 = gru_cell_forward(x2, h2, packed_f32, dims=dims, batch_block=8)
    jax.block_until_ready((y2, hn2))
    y2_ref, hn2_ref = gru_cell_ref(x2, h2, params)
    assert jnp.allclose(y2, y2_ref, atol=1e-4, rtol=1e-4)
    assert jnp.allclose(hn2, hn2_ref, atol=1e-4, rtol=1e-4)

    # --- 3) bf16 weights on the MXU (halved weight DMA), f32 gating math ---
    packed_bf16, _ = pack_params(params, matmul_dtype=jnp.bfloat16)
    y3, hn3 = gru_cell_forward(x, h, packed_bf16, dims=dims)
    jax.block_until_ready((y3, hn3))
    assert jnp.allclose(y3, y_ref, atol=5e-2, rtol=5e-2)
    assert jnp.allclose(hn3, hn_ref, atol=5e-2, rtol=5e-2)

    print("KERNEL_OK")
</pallas_src>

<mosaic_0001>
module attributes {stable_mosaic.version = 11 : i64} {
  func.func @gru_cell_kernel(%arg0: i32, %arg1: memref<8x16xf32, #tpu.memory_space<vmem>>, %arg2: memref<8x128xf32, #tpu.memory_space<vmem>>, %arg3: memref<128x256xf32, #tpu.memory_space<vmem>>, %arg4: memref<16x384xf32, #tpu.memory_space<vmem>>, %arg5: memref<1x384xf32, #tpu.memory_space<vmem>>, %arg6: memref<128x128xf32, #tpu.memory_space<vmem>>, %arg7: memref<128x128xf32, #tpu.memory_space<vmem>>, %arg8: memref<1x128xf32, #tpu.memory_space<vmem>>, %arg9: memref<8x128xf32, #tpu.memory_space<vmem>>, %arg10: memref<8x128xf32, #tpu.memory_space<vmem>>) attributes {dimension_semantics = [#tpu.dimension_semantics<parallel>], iteration_bounds = array<i64: 1>, scalar_prefetch = 0 : i64, scratch_operands = 0 : i64, tpu.core_type = #tpu.core_type<tc>, window_params = [{transform_indices = @transform_0, window_bounds = array<i64: 8, 16>}, {transform_indices = @transform_1, window_bounds = array<i64: 8, 128>}, {pipeline_mode = #tpu.pipeline_mode<synchronous>, transform_indices = @transform_2, window_bounds = array<i64: 128, 256>}, {pipeline_mode = #tpu.pipeline_mode<synchronous>, transform_indices = @transform_3, window_bounds = array<i64: 16, 384>}, {pipeline_mode = #tpu.pipeline_mode<synchronous>, transform_indices = @transform_4, window_bounds = array<i64: 1, 384>}, {pipeline_mode = #tpu.pipeline_mode<synchronous>, transform_indices = @transform_5, window_bounds = array<i64: 128, 128>}, {pipeline_mode = #tpu.pipeline_mode<synchronous>, transform_indices = @transform_6, window_bounds = array<i64: 128, 128>}, {pipeline_mode = #tpu.pipeline_mode<synchronous>, transform_indices = @transform_7, window_bounds = array<i64: 1, 128>}, {transform_indices = @transform_8, window_bounds = array<i64: 8, 128>}, {transform_indices = @transform_9, window_bounds = array<i64: 8, 128>}]} {
    %c0 = arith.constant 0 : index
    %c0_0 = arith.constant 0 : index
    %0 = vector.load %arg2[%c0, %c0_0] : memref<8x128xf32, #tpu.memory_space<vmem>>, vector<8x128xf32>
    %c0_1 = arith.constant 0 : index
    %c0_2 = arith.constant 0 : index
    %1 = vector.load %arg1[%c0_1, %c0_2] : memref<8x16xf32, #tpu.memory_space<vmem>>, vector<8x16xf32>
    %c0_3 = arith.constant 0 : index
    %c0_4 = arith.constant 0 : index
    %2 = vector.load %arg4[%c0_3, %c0_4] : memref<16x384xf32, #tpu.memory_space<vmem>>, vector<16x384xf32>
    %cst = arith.constant dense<0.000000e+00> : vector<8x384xf32>
    %3 = tpu.matmul %1, %2, %cst {dimension_numbers = #tpu.dot_dimension_numbers<[1], [0], [0], [1], [0, 0, 1, 1], [], []>} : vector<8x16xf32>, vector<16x384xf32>, vector<8x384xf32> -> vector<8x384xf32>
    %c0_5 = arith.constant 0 : index
    %c0_6 = arith.constant 0 : index
    %4 = vector.load %arg5[%c0_5, %c0_6] : memref<1x384xf32, #tpu.memory_space<vmem>>, vector<1x384xf32>
    %5 = vector.broadcast %4 : vector<1x384xf32> to vector<8x384xf32>
    %6 = arith.addf %3, %5 : vector<8x384xf32>
    %c0_7 = arith.constant 0 : index
    %c0_8 = arith.constant 0 : index
    %7 = vector.load %arg3[%c0_7, %c0_8] : memref<128x256xf32, #tpu.memory_space<vmem>>, vector<128x256xf32>
    %cst_9 = arith.constant dense<0.000000e+00> : vector<8x256xf32>
    %8 = tpu.matmul %0, %7, %cst_9 {dimension_numbers = #tpu.dot_dimension_numbers<[1], [0], [0], [1], [0, 0, 1, 1], [], []>} : vector<8x128xf32>, vector<128x256xf32>, vector<8x256xf32> -> vector<8x256xf32>
    %9 = vector.extract_strided_slice %8 {offsets = [0, 0], sizes = [8, 128], strides = [1, 1]} : vector<8x256xf32> to vector<8x128xf32>
    %10 = vector.extract_strided_slice %6 {offsets = [0, 0], sizes = [8, 128], strides = [1, 1]} : vector<8x384xf32> to vector<8x128xf32>
    %11 = arith.addf %9, %10 : vector<8x128xf32>
    %12 = arith.negf %11 : vector<8x128xf32>
    %13 = math.exp %12 : vector<8x128xf32>
    %cst_10 = arith.constant 1.000000e+00 : f32
    %14 = vector.broadcast %cst_10 : f32 to vector<8x128xf32>
    %15 = arith.addf %14, %13 : vector<8x128xf32>
    %16 = arith.divf %14, %15 : vector<8x128xf32>
    %17 = vector.extract_strided_slice %8 {offsets = [0, 128], sizes = [8, 128], strides = [1, 1]} : vector<8x256xf32> to vector<8x128xf32>
    %18 = vector.extract_strided_slice %6 {offsets = [0, 128], sizes = [8, 128], strides = [1, 1]} : vector<8x384xf32> to vector<8x128xf32>
    %19 = arith.addf %17, %18 : vector<8x128xf32>
    %20 = arith.negf %19 : vector<8x128xf32>
    %21 = math.exp %20 : vector<8x128xf32>
    %cst_11 = arith.constant 1.000000e+00 : f32
    %22 = vector.broadcast %cst_11 : f32 to vector<8x128xf32>
    %23 = arith.addf %22, %21 : vector<8x128xf32>
    %24 = arith.divf %22, %23 : vector<8x128xf32>
    %25 = arith.mulf %24, %0 : vector<8x128xf32>
    %c0_12 = arith.constant 0 : index
    %c0_13 = arith.constant 0 : index
    %26 = vector.load %arg6[%c0_12, %c0_13] : memref<128x128xf32, #tpu.memory_space<vmem>>, vector<128x128xf32>
    %cst_14 = arith.constant dense<0.000000e+00> : vector<8x128xf32>
    %27 = tpu.matmul %25, %26, %cst_14 {dimension_numbers = #tpu.dot_dimension_numbers<[1], [0], [0], [1], [0, 0, 1, 1], [], []>} : vector<8x128xf32>, vector<128x128xf32>, vector<8x128xf32> -> vector<8x128xf32>
    %28 = vector.extract_strided_slice %6 {offsets = [0, 256], sizes = [8, 128], strides = [1, 1]} : vector<8x384xf32> to vector<8x128xf32>
    %29 = arith.addf %27, %28 : vector<8x128xf32>
    %30 = math.tanh %29 : vector<8x128xf32>
    %31 = arith.subf %30, %0 : vector<8x128xf32>
    %32 = arith.mulf %16, %31 : vector<8x128xf32>
    %33 = arith.addf %0, %32 : vector<8x128xf32>
    %c0_15 = arith.constant 0 : index
    %c0_16 = arith.constant 0 : index
    %34 = vector.load %arg7[%c0_15, %c0_16] : memref<128x128xf32, #tpu.memory_space<vmem>>, vector<128x128xf32>
    %cst_17 = arith.constant dense<0.000000e+00> : vector<8x128xf32>
    %35 = tpu.matmul %33, %34, %cst_17 {dimension_numbers = #tpu.dot_dimension_numbers<[1], [0], [0], [1], [0, 0, 1, 1], [], []>} : vector<8x128xf32>, vector<128x128xf32>, vector<8x128xf32> -> vector<8x128xf32>
    %c0_18 = arith.constant 0 : index
    %c0_19 = arith.constant 0 : index
    %36 = vector.load %arg8[%c0_18, %c0_19] : memref<1x128xf32, #tpu.memory_space<vmem>>, vector<1x128xf32>
    %37 = vector.broadcast %36 : vector<1x128xf32> to vector<8x128xf32>
    %38 = arith.addf %35, %37 : vector<8x128xf32>
    %c0_20 = arith.constant 0 : index
    %c0_21 = arith.constant 0 : index
    %39 = vector.load %arg9[%c0_20, %c0_21] : memref<8x128xf32, #tpu.memory_space<vmem>>, vector<8x128xf32>
    tpu.vector_store %arg9[%c0_20, %c0_21], %38 {strides = array<i32>} : memref<8x128xf32, #tpu.memory_space<vmem>>, vector<8x128xf32>,
    %c0_22 = arith.constant 0 : index
    %c0_23 = arith.constant 0 : index
    %40 = vector.load %arg10[%c0_22, %c0_23] : memref<8x128xf32, #tpu.memory_space<vmem>>, vector<8x128xf32>
    tpu.vector_store %arg10[%c0_22, %c0_23], %33 {strides = array<i32>} : memref<8x128xf32, #tpu.memory_space<vmem>>, vector<8x128xf32>,
    return
  }
  func.func @transform_0(%arg0: i32) -> (i32, i32) {
    %c0_i32 = arith.constant 0 : i32
    %c0_i32_0 = arith.constant 0 : i32
    return %arg0, %c0_i32 : i32, i32
  }
  func.func @transform_1(%arg0: i32) -> (i32, i32) {
    %c0_i32 = arith.constant 0 : i32
    %c0_i32_0 = arith.constant 0 : i32
    return %arg0, %c0_i32 : i32, i32
  }
  func.func @transform_2(%arg0: i32) -> (i32, i32) {
    %c0_i32 = arith.constant 0 : i32
    %c0_i32_0 = arith.constant 0 : i32
    %c0_i32_1 = arith.constant 0 : i32
    return %c0_i32, %c0_i32_0 : i32, i32
  }
  func.func @transform_3(%arg0: i32) -> (i32, i32) {
    %c0_i32 = arith.constant 0 : i32
    %c0_i32_0 = arith.constant 0 : i32
    %c0_i32_1 = arith.constant 0 : i32
    return %c0_i32, %c0_i32_0 : i32, i32
  }
  func.func @transform_4(%arg0: i32) -> (i32, i32) {
    %c0_i32 = arith.constant 0 : i32
    %c0_i32_0 = arith.constant 0 : i32
    %c0_i32_1 = arith.constant 0 : i32
    return %c0_i32, %c0_i32_0 : i32, i32
  }
  func.func @transform_5(%arg0: i32) -> (i32, i32) {
    %c0_i32 = arith.constant 0 : i32
    %c0_i32_0 = arith.constant 0 : i32
    %c0_i32_1 = arith.constant 0 : i32
    return %c0_i32, %c0_i32_0 : i32, i32
  }
  func.func @transform_6(%arg0: i32) -> (i32, i32) {
    %c0_i32 = arith.constant 0 : i32
    %c0_i32_0 = arith.constant 0 : i32
    %c0_i32_1 = arith.constant 0 : i32
    return %c0_i32, %c0_i32_0 : i32, i32
  }
  func.func @transform_7(%arg0: i32) -> (i32, i32) {
    %c0_i32 = arith.constant 0 : i32
    %c0_i32_0 = arith.constant 0 : i32
    %c0_i32_1 = arith.constant 0 : i32
    return %c0_i32, %c0_i32_0 : i32, i32
  }
  func.func @transform_8(%arg0: i32) -> (i32, i32) {
    %c0_i32 = arith.constant 0 : i32
    %c0_i32_0 = arith.constant 0 : i32
    return %arg0, %c0_i32 : i32, i32
  }
  func.func @transform_9(%arg0: i32) -> (i32, i32) {
    %c0_i32 = arith.constant 0 : i32
    %c0_i32_0 = arith.constant 0 : i32
    return %arg0, %c0_i32 : i32, i32
  }
}

</mosaic_0001>

<llo_original>
// kernel: gru_cell_forward.1
$region0: #{gru_cell_forward.1}
  #allocation0 [shape = 'u32[]', space=smem, size = 0x4, offset = 0x4, fixed_abs, tag = 'smem constant byte address 0x4 - core index']
  #allocation1 [shape = 'u32[144,128]{1,0:T(1,128)}', space=vmem, size = 0x12000, scoped, tag = 'internal scratch']
  %s0 = inlined_call_operand.vmem [shape: f32[8,16], index: 0, kind: input, shape index: {}]
  %s1 = inlined_call_operand.vmem [shape: f32[8,128], index: 1, kind: input, shape index: {}]
  %s2 = inlined_call_operand.hbm [shape: f32[128,256], index: 2, kind: input, shape index: {}]
  %s3 = inlined_call_operand.hbm [shape: f32[16,384], index: 3, kind: input, shape index: {}]
  %s4 = inlined_call_operand.vmem [shape: f32[1,384], index: 4, kind: input, shape index: {}]
  %s5 = inlined_call_operand.hbm [shape: f32[128,128], index: 5, kind: input, shape index: {}]
  %s6 = inlined_call_operand.hbm [shape: f32[128,128], index: 6, kind: input, shape index: {}]
  %s7 = inlined_call_operand.vmem [shape: f32[1,128], index: 7, kind: input, shape index: {}]
  %s8 = inlined_call_operand.hbm [shape: f32[8,128], index: 8, kind: output, shape index: {0}]
  %s9 = inlined_call_operand.hbm [shape: f32[8,128], index: 9, kind: output, shape index: {1}]
  %10 = xla_tuple %s8, %s9
  %s11 = sld [smem:[#allocation0]]
  $region66: #{gru_cell_forward.1} parent=0
    _
  %s13 = ssub.s32 1, %s11
  %s14 = scalar_select 0, %s13, %s11
  $region1: #{gru_cell_forward.1} parent=0
    #allocation2 [shape = 'u8[131072]{0}', space=vmem, size = 0x20000, scoped, tag = 'input window, operand 2, single buffered']
    #allocation3 [shape = 's32[1]{0}', space=sflag, size = 0x4, scoped, tag = 'scoped memory for gru_cell_forward.1']
    #allocation4 [shape = 's32[1]{0}', space=sflag, size = 0x4, scoped, tag = 'scoped memory for gru_cell_forward.1']
    #allocation5 [shape = 'u8[24576]{0}', space=vmem, size = 0x6000, scoped, tag = 'input window, operand 3, single buffered']
    #allocation6 [shape = 's32[1]{0}', space=sflag, size = 0x4, scoped, tag = 'scoped memory for gru_cell_forward.1']
    #allocation7 [shape = 'u8[65536]{0}', space=vmem, size = 0x10000, scoped, tag = 'input window, operand 5, single buffered']
    #allocation8 [shape = 'u8[65536]{0}', space=vmem, size = 0x10000, scoped, tag = 'input window, operand 6, single buffered']
    #allocation9 [shape = 's32[1]{0}', space=sflag, size = 0x4, scoped, tag = 'scoped memory for gru_cell_forward.1']
    #allocation10 [shape = 'u8[4096]{0}', space=vmem, size = 0x1000, scoped, tag = 'output window, operand 0, single buffered']
    #allocation11 [shape = 'u8[4096]{0}', space=vmem, size = 0x1000, scoped, tag = 'output window, operand 1, single buffered']
    #allocation12 [shape = 's32[1]{0}', space=sflag, size = 0x4, scoped, tag = 'scoped memory for gru_cell_forward.1']
    %15 = vsyncpa [#allocation3], 0
    %16 = vsyncpa [#allocation6], 0
    %17 = vsyncpa [#allocation9], 0
    %18 = vsyncpa [#allocation4], 0
    %19 = vsyncpa [#allocation12], 0
    // Predicated region
    $region2: #{gru_cell_forward.1} parent=1 // pred_check
      _
    $region3: #{gru_cell_forward.1} parent=1 // pred_check_branch
      %21 = sbr.rel (0) target = $region5
    $region4: #{gru_cell_forward.1} parent=1 // pred_region
      _
    $region5: #{gru_cell_forward.1} parent=1 // pred_fallthru
      _
    // Predicated region
    $region6: #{gru_cell_forward.1} parent=1 // pred_check
      _
    $region7: #{gru_cell_forward.1} parent=1 // pred_check_branch
      %23 = sbr.rel (0) target = $region9
    $region8: #{gru_cell_forward.1} parent=1 // pred_region
      _
    $region9: #{gru_cell_forward.1} parent=1 // pred_fallthru
      _
    // Predicated region
    $region10: #{gru_cell_forward.1} parent=1 // pred_check
      _
    $region11: #{gru_cell_forward.1} parent=1 // pred_check_branch
      %25 = sbr.rel (0) target = $region13
    $region12: #{gru_cell_forward.1} parent=1 // pred_region
      %s27 = ssub.s32 4096, 4096
      %28 = vsyncadd [#allocation3], %s27
      %s29 = sshll.u32 [#allocation2], 4
      %s30 = int_to_ptr.vmem [resolvable:$true] %s29
      %35 = dma.hbm_to_vmem [thread:$0]  %s2, 4096, %s30, [#allocation3], 256, 256, 16
    $region13: #{gru_cell_forward.1} parent=1 // pred_fallthru
      _
    // Predicated region
    $region14: #{gru_cell_forward.1} parent=1 // pred_check
      _
    $region15: #{gru_cell_forward.1} parent=1 // pred_check_branch
      %37 = sbr.rel (0) target = $region17
    $region16: #{gru_cell_forward.1} parent=1 // pred_region
      %s39 = ssub.s32 768, 768
      %40 = vsyncadd [#allocation6], %s39
      %s41 = sshll.u32 [#allocation5], 4
      %s42 = int_to_ptr.vmem [resolvable:$true] %s41
      %47 = dma.hbm_to_vmem [thread:$0]  %s3, 768, %s42, [#allocation6], 384, 384, 24
    $region17: #{gru_cell_forward.1} parent=1 // pred_fallthru
      _
    // Predicated region
    $region18: #{gru_cell_forward.1} parent=1 // pred_check
      _
    $region19: #{gru_cell_forward.1} parent=1 // pred_check_branch
      %49 = sbr.rel (0) target = $region21
    $region20: #{gru_cell_forward.1} parent=1 // pred_region
      _
    $region21: #{gru_cell_forward.1} parent=1 // pred_fallthru
      _
    // Predicated region
    $region22: #{gru_cell_forward.1} parent=1 // pred_check
      _
    $region23: #{gru_cell_forward.1} parent=1 // pred_check_branch
      %51 = sbr.rel (0) target = $region25
    $region24: #{gru_cell_forward.1} parent=1 // pred_region
      %s53 = ssub.s32 2048, 2048
      %54 = vsyncadd [#allocation6], %s53
      %s55 = sshll.u32 [#allocation7], 4
      %s56 = int_to_ptr.vmem [resolvable:$true] %s55
      %61 = dma.hbm_to_vmem [thread:$0]  %s5, 2048, %s56, [#allocation6], 128, 128, 8
    $region25: #{gru_cell_forward.1} parent=1 // pred_fallthru
      _
    // Predicated region
    $region26: #{gru_cell_forward.1} parent=1 // pred_check
      _
    $region27: #{gru_cell_forward.1} parent=1 // pred_check_branch
      %63 = sbr.rel (0) target = $region29
    $region28: #{gru_cell_forward.1} parent=1 // pred_region
      %s65 = ssub.s32 2048, 2048
      %66 = vsyncadd [#allocation9], %s65
      %s67 = sshll.u32 [#allocation8], 4
      %s68 = int_to_ptr.vmem [resolvable:$true] %s67
      %73 = dma.hbm_to_vmem [thread:$0]  %s6, 2048, %s68, [#allocation9], 128, 128, 8
    $region29: #{gru_cell_forward.1} parent=1 // pred_fallthru
      _
    // Predicated region
    $region30: #{gru_cell_forward.1} parent=1 // pred_check
      _
    $region31: #{gru_cell_forward.1} parent=1 // pred_check_branch
      %75 = sbr.rel (0) target = $region33
    $region32: #{gru_cell_forward.1} parent=1 // pred_region
      _
    $region33: #{gru_cell_forward.1} parent=1 // pred_fallthru
      _
    // Predicated region
    $region34: #{gru_cell_forward.1} parent=1 // pred_check
      _
    $region35: #{gru_cell_forward.1} parent=1 // pred_check_branch
      %77 = sbr.rel (0) target = $region37
    $region36: #{gru_cell_forward.1} parent=1 // pred_region
      %78 = dma.done [#allocation3], 4096
    $region37: #{gru_cell_forward.1} parent=1 // pred_fallthru
      _
    // Predicated region
    $region38: #{gru_cell_forward.1} parent=1 // pred_check
      _
    $region39: #{gru_cell_forward.1} parent=1 // pred_check_branch
      %80 = sbr.rel (0) target = $region41
    $region40: #{gru_cell_forward.1} parent=1 // pred_region
      %81 = dma.done [#allocation6], 768
    $region41: #{gru_cell_forward.1} parent=1 // pred_fallthru
      _
    // Predicated region
    $region42: #{gru_cell_forward.1} parent=1 // pred_check
      _
    $region43: #{gru_cell_forward.1} parent=1 // pred_check_branch
      %83 = sbr.rel (0) target = $region45
    $region44: #{gru_cell_forward.1} parent=1 // pred_region
      %84 = dma.done [#allocation6], 2048
    $region45: #{gru_cell_forward.1} parent=1 // pred_fallthru
      _
    // Predicated region
    $region46: #{gru_cell_forward.1} parent=1 // pred_check
      _
    $region47: #{gru_cell_forward.1} parent=1 // pred_check_branch
      %86 = sbr.rel (0) target = $region49
    $region48: #{gru_cell_forward.1} parent=1 // pred_region
      %87 = dma.done [#allocation9], 2048
    $region49: #{gru_cell_forward.1} parent=1 // pred_fallthru
      _
    %v88 = vld [vmem:[%s1] sm:$0xff]
    %v89 = vld [vmem:[%s0] sm:$0xff]
    %v90 = vld [vmem:[#allocation5] sm:$0xff]
    %v91 = vld [vmem:[#allocation5 + $0x8] sm:$0xff]
    %v92 = vld [vmem:[#allocation5 + $0x10] sm:$0xff]
    %v93 = vld [vmem:[#allocation5 + $0x18] sm:$0xff]
    %v94 = vld [vmem:[#allocation5 + $0x20] sm:$0xff]
    %v95 = vld [vmem:[#allocation5 + $0x28] sm:$0xff]
    %v96 = vld [vmem:[%s4] sm:$0x7]
    %v98 = vlaneseq
    %v99 = vshrl.u32 %v98, 7
    %v100 = vsub.s32 0, %v99
    %v101 = vrot.slane %v96, %v100
    %v102 = vlaneseq
    %v103 = vshrl.u32 %v102, 7
    %v104 = vsub.s32 1, %v103
    %v105 = vrot.slane %v96, %v104
    %v106 = vlaneseq
    %v107 = vshrl.u32 %v106, 7
    %v108 = vsub.s32 2, %v107
    %v109 = vrot.slane %v96, %v108
    %vm113 = vcmask 130048
    %v115 = vsel %vm113, %v89, 0
    %117 = vmatprep.subr.mxu0 0.0
    %118 = vmatpush1.msra.mxu0 0.0
    %119 = vmatprep.subr.mxu0 0.0
    %120 = vmatpush1.msra.mxu0 0.0
    %121 = vmatprep.subr.mxu0 0.0
    %122 = vmatpush1.msra.mxu0 0.0
    %123 = vmatprep.subr.mxu0 0.0
    %124 = vmatpush1.msra.mxu0 0.0
    %125 = vmatprep.subr.mxu0 0.0
    %126 = vmatpush1.msra.mxu0 0.0
    %127 = vmatprep.subr.mxu0 0.0
    %128 = vmatpush1.msra.mxu0 0.0
    %129 = vmatprep.subr.mxu0 0.0
    %130 = vmatpush1.msra.mxu0 0.0
    %131 = vmatprep.subr.mxu0 0.0
    %132 = vmatpush1.msra.mxu0 0.0
    %133 = vmatprep.subr.mxu0 0.0
    %134 = vmatpush1.msra.mxu0 0.0
    %135 = vmatprep.subr.mxu0 0.0
    %136 = vmatpush1.msra.mxu0 0.0
    %137 = vmatprep.subr.mxu0 0.0
    %138 = vmatpush1.msra.mxu0 0.0
    %139 = vmatprep.subr.mxu0 0.0
    %140 = vmatpush1.msra.mxu0 0.0
    %141 = vmatprep.subr.mxu0 0.0
    %142 = vmatpush1.msra.mxu0 0.0
    %143 = vmatprep.subr.mxu0 0.0
    %144 = vmatpush1.msra.mxu0 0.0
    %145 = vmatprep.subr.mxu0 %v94
    %146 = vmatpush1.msra.mxu0 %v93
    %147 = vmatprep.subr.mxu0 %v91
    %148 = vmatpush1.msra.mxu0 %v90
    %149 = vmatprep.subr.mxu0 0.0
    %150 = vmatpush2.msra.mxu0 0.0
    %151 = vmatprep.subr.mxu0 0.0
    %152 = vmatpush2.msra.mxu0 0.0
    %153 = vmatprep.subr.mxu0 0.0
    %154 = vmatpush2.msra.mxu0 0.0
    %155 = vmatprep.subr.mxu0 0.0
    %156 = vmatpush2.msra.mxu0 0.0
    %157 = vmatprep.subr.mxu0 0.0
    %158 = vmatpush2.msra.mxu0 0.0
    %159 = vmatprep.subr.mxu0 0.0
    %160 = vmatpush2.msra.mxu0 0.0
    %161 = vmatprep.subr.mxu0 0.0
    %162 = vmatpush2.msra.mxu0 0.0
    %163 = vmatprep.subr.mxu0 0.0
    %164 = vmatpush2.msra.mxu0 0.0
    %165 = vmatprep.subr.mxu0 0.0
    %166 = vmatpush2.msra.mxu0 0.0
    %167 = vmatprep.subr.mxu0 0.0
    %168 = vmatpush2.msra.mxu0 0.0
    %169 = vmatprep.subr.mxu0 0.0
    %170 = vmatpush2.msra.mxu0 0.0
    %171 = vmatprep.subr.mxu0 0.0
    %172 = vmatpush2.msra.mxu0 0.0
    %173 = vmatprep.subr.mxu0 0.0
    %174 = vmatpush2.msra.mxu0 0.0
    %175 = vmatprep.subr.mxu0 0.0
    %176 = vmatpush2.msra.mxu0 0.0
    %177 = vmatprep.subr.mxu0 0.0
    %178 = vmatpush2.msra.mxu0 0.0
    %179 = vmatprep.subr.mxu0 0.0
    %180 = vmatpush2.msra.mxu0 0.0
    %181 = vmatprep.mubr.f32.mxu0 0.0
    %182 = vmatmul.mubr.f32.gmra.mxu0 %v115
    %v183 = vpop.f32.mrf.mxu0
    %v184 = vadd.f32 %v101, %v183
    %v185 = vpop.f32.mrf.mxu0
    %v186 = vadd.f32 %v105, %v185
    %187 = vdwg.mxu0
    %188 = vmatprep.subr.mxu0 0.0
    %189 = vmatpush1.msra.mxu0 0.0
    %190 = vmatprep.subr.mxu0 0.0
    %191 = vmatpush1.msra.mxu0 0.0
    %192 = vmatprep.subr.mxu0 0.0
    %193 = vmatpush1.msra.mxu0 0.0
    %194 = vmatprep.subr.mxu0 0.0
    %195 = vmatpush1.msra.mxu0 0.0
    %196 = vmatprep.subr.mxu0 0.0
    %197 = vmatpush1.msra.mxu0 0.0
    %198 = vmatprep.subr.mxu0 0.0
    %199 = vmatpush1.msra.mxu0 0.0
    %200 = vmatprep.subr.mxu0 0.0
    %201 = vmatpush1.msra.mxu0 0.0
    %202 = vmatprep.subr.mxu0 0.0
    %203 = vmatpush1.msra.mxu0 0.0
    %204 = vmatprep.subr.mxu0 0.0
    %205 = vmatpush1.msra.mxu0 0.0
    %206 = vmatprep.subr.mxu0 0.0
    %207 = vmatpush1.msra.mxu0 0.0
    %208 = vmatprep.subr.mxu0 0.0
    %209 = vmatpush1.msra.mxu0 0.0
    %210 = vmatprep.subr.mxu0 0.0
    %211 = vmatpush1.msra.mxu0 0.0
    %212 = vmatprep.subr.mxu0 0.0
    %213 = vmatpush1.msra.mxu0 0.0
    %214 = vmatprep.subr.mxu0 0.0
    %215 = vmatpush1.msra.mxu0 0.0
    %216 = vmatprep.subr.mxu0 0.0
    %217 = vmatpush1.msra.mxu0 %v95
    %218 = vmatprep.subr.mxu0 0.0
    %219 = vmatpush1.msra.mxu0 %v92
    %220 = vmatprep.subr.mxu0 0.0
    %221 = vmatpush2.msra.mxu0 0.0
    %222 = vmatprep.subr.mxu0 0.0
    %223 = vmatpush2.msra.mxu0 0.0
    %224 = vmatprep.subr.mxu0 0.0
    %225 = vmatpush2.msra.mxu0 0.0
    %226 = vmatprep.subr.mxu0 0.0
    %227 = vmatpush2.msra.mxu0 0.0
    %228 = vmatprep.subr.mxu0 0.0
    %229 = vmatpush2.msra.mxu0 0.0
    %230 = vmatprep.subr.mxu0 0.0
    %231 = vmatpush2.msra.mxu0 0.0
    %232 = vmatprep.subr.mxu0 0.0
    %233 = vmatpush2.msra.mxu0 0.0
    %234 = vmatprep.subr.mxu0 0.0
    %235 = vmatpush2.msra.mxu0 0.0
    %236 = vmatprep.subr.mxu0 0.0
    %237 = vmatpush2.msra.mxu0 0.0
    %238 = vmatprep.subr.mxu0 0.0
    %239 = vmatpush2.msra.mxu0 0.0
    %240 = vmatprep.subr.mxu0 0.0
    %241 = vmatpush2.msra.mxu0 0.0
    %242 = vmatprep.subr.mxu0 0.0
    %243 = vmatpush2.msra.mxu0 0.0
    %244 = vmatprep.subr.mxu0 0.0
    %245 = vmatpush2.msra.mxu0 0.0
    %246 = vmatprep.subr.mxu0 0.0
    %247 = vmatpush2.msra.mxu0 0.0
    %248 = vmatprep.subr.mxu0 0.0
    %249 = vmatpush2.msra.mxu0 0.0
    %250 = vmatprep.subr.mxu0 0.0
    %251 = vmatpush2.msra.mxu0 0.0
    %252 = vmatprep.mubr.f32.mxu0 0.0
    %253 = vmatmul.mubr.f32.gmra.mxu0 %v115
    %v254 = vpop.f32.mrf.mxu0
    %v255 = vadd.f32 %v109, %v254
    %v256 = vpop.f32.mrf.mxu0
    %257 = vdwg.mxu0
    %v258 = vld [vmem:[#allocation2] sm:$0xff]
    %v259 = vld [vmem:[#allocation2 + $0x8] sm:$0xff]
    %v260 = vld [vmem:[#allocation2 + $0x10] sm:$0xff]
    %v261 = vld [vmem:[#allocation2 + $0x18] sm:$0xff]
    %v262 = vld [vmem:[#allocation2 + $0x20] sm:$0xff]
    %v263 = vld [vmem:[#allocation2 + $0x28] sm:$0xff]
    %v264 = vld [vmem:[#allocation2 + $0x30] sm:$0xff]
    %v265 = vld [vmem:[#allocation2 + $0x38] sm:$0xff]
    %v266 = vld [vmem:[#allocation2 + $0x40] sm:$0xff]
    %v267 = vld [vmem:[#allocation2 + $0x48] sm:$0xff]
    %v268 = vld [vmem:[#allocation2 + $0x50] sm:$0xff]
    %v269 = vld [vmem:[#allocation2 + $0x58] sm:$0xff]
    %v270 = vld [vmem:[#allocation2 + $0x60] sm:$0xff]
    %v271 = vld [vmem:[#allocation2 + $0x68] sm:$0xff]
    %v272 = vld [vmem:[#allocation2 + $0x70] sm:$0xff]
    %v273 = vld [vmem:[#allocation2 + $0x78] sm:$0xff]
    %v274 = vld [vmem:[#allocation2 + $0x80] sm:$0xff]
    %v275 = vld [vmem:[#allocation2 + $0x88] sm:$0xff]
    %v276 = vld [vmem:[#allocation2 + $0x90] sm:$0xff]
    %v277 = vld [vmem:[#allocation2 + $0x98] sm:$0xff]
    %v278 = vld [vmem:[#allocation2 + $0xa0] sm:$0xff]
    %v279 = vld [vmem:[#allocation2 + $0xa8] sm:$0xff]
    %v280 = vld [vmem:[#allocation2 + $0xb0] sm:$0xff]
    %v281 = vld [vmem:[#allocation2 + $0xb8] sm:$0xff]
    %v282 = vld [vmem:[#allocation2 + $0xc0] sm:$0xff]
    %v283 = vld [vmem:[#allocation2 + $0xc8] sm:$0xff]
    %v284 = vld [vmem:[#allocation2 + $0xd0] sm:$0xff]
    %v285 = vld [vmem:[#allocation2 + $0xd8] sm:$0xff]
    %v286 = vld [vmem:[#allocation2 + $0xe0] sm:$0xff]
    %v287 = vld [vmem:[#allocation2 + $0xe8] sm:$0xff]
    %v288 = vld [vmem:[#allocation2 + $0xf0] sm:$0xff]
    %v289 = vld [vmem:[#allocation2 + $0xf8] sm:$0xff]
    %290 = vmatprep.subr.mxu0 %v289
    %291 = vmatpush1.msra.mxu0 %v288
    %292 = vmatprep.subr.mxu0 %v287
    %293 = vmatpush1.msra.mxu0 %v286
    %294 = vmatprep.subr.mxu0 %v285
    %295 = vmatpush1.msra.mxu0 %v284
    %296 = vmatprep.subr.mxu0 %v283
    %297 = vmatpush1.msra.mxu0 %v282
    %298 = vmatprep.subr.mxu0 %v281
    %299 = vmatpush1.msra.mxu0 %v280
    %300 = vmatprep.subr.mxu0 %v279
    %301 = vmatpush1.msra.mxu0 %v278
    %302 = vmatprep.subr.mxu0 %v277
    %303 = vmatpush1.msra.mxu0 %v276
    %304 = vmatprep.subr.mxu0 %v275
    %305 = vmatpush1.msra.mxu0 %v274
    %306 = vmatprep.subr.mxu0 %v273
    %307 = vmatpush1.msra.mxu0 %v272
    %308 = vmatprep.subr.mxu0 %v271
    %309 = vmatpush1.msra.mxu0 %v270
    %310 = vmatprep.subr.mxu0 %v269
    %311 = vmatpush1.msra.mxu0 %v268
    %312 = vmatprep.subr.mxu0 %v267
    %313 = vmatpush1.msra.mxu0 %v266
    %314 = vmatprep.subr.mxu0 %v265
    %315 = vmatpush1.msra.mxu0 %v264
    %316 = vmatprep.subr.mxu0 %v263
    %317 = vmatpush1.msra.mxu0 %v262
    %318 = vmatprep.subr.mxu0 %v261
    %319 = vmatpush1.msra.mxu0 %v260
    %320 = vmatprep.subr.mxu0 %v259
    %321 = vmatpush1.msra.mxu0 %v258
    %322 = vmatprep.subr.mxu0 0.0
    %323 = vmatpush2.msra.mxu0 0.0
    %324 = vmatprep.subr.mxu0 0.0
    %325 = vmatpush2.msra.mxu0 0.0
    %326 = vmatprep.subr.mxu0 0.0
    %327 = vmatpush2.msra.mxu0 0.0
    %328 = vmatprep.subr.mxu0 0.0
    %329 = vmatpush2.msra.mxu0 0.0
    %330 = vmatprep.subr.mxu0 0.0
    %331 = vmatpush2.msra.mxu0 0.0
    %332 = vmatprep.subr.mxu0 0.0
    %333 = vmatpush2.msra.mxu0 0.0
    %334 = vmatprep.subr.mxu0 0.0
    %335 = vmatpush2.msra.mxu0 0.0
    %336 = vmatprep.subr.mxu0 0.0
    %337 = vmatpush2.msra.mxu0 0.0
    %338 = vmatprep.subr.mxu0 0.0
    %339 = vmatpush2.msra.mxu0 0.0
    %340 = vmatprep.subr.mxu0 0.0
    %341 = vmatpush2.msra.mxu0 0.0
    %342 = vmatprep.subr.mxu0 0.0
    %343 = vmatpush2.msra.mxu0 0.0
    %344 = vmatprep.subr.mxu0 0.0
    %345 = vmatpush2.msra.mxu0 0.0
    %346 = vmatprep.subr.mxu0 0.0
    %347 = vmatpush2.msra.mxu0 0.0
    %348 = vmatprep.subr.mxu0 0.0
    %349 = vmatpush2.msra.mxu0 0.0
    %350 = vmatprep.subr.mxu0 0.0
    %351 = vmatpush2.msra.mxu0 0.0
    %352 = vmatprep.subr.mxu0 0.0
    %353 = vmatpush2.msra.mxu0 0.0
    %354 = vmatprep.mubr.f32.mxu0 0.0
    %355 = vmatmul.mubr.f32.gmra.mxu0 %v88
    %v356 = vpop.f32.mrf.mxu0
    %v357 = vadd.f32 0.0, %v356
    %v358 = vpop.f32.mrf.mxu0
    %v359 = vadd.f32 0.0, %v358
    %360 = vdwg.mxu0
    %v361 = vadd.f32 %v357, %v184
    %v362 = vxor.u32 %v361, 2147483648
    %v363 = vmul.f32 %v362, 1.442695
    %v364 = vpow.pop %v363
    %v365 = vadd.f32 %v364, 1.0
    %v366 = vrcp.pop %v365
    %v367 = vmul.f32 1.0, %v366
    %v368 = vadd.f32 %v359, %v186
    %v369 = vxor.u32 %v368, 2147483648
    %v370 = vmul.f32 %v369, 1.442695
    %v371 = vpow.pop %v370
    %v372 = vadd.f32 %v371, 1.0
    %v373 = vrcp.pop %v372
    %v374 = vmul.f32 1.0, %v373
    %v375 = vmul.f32 %v374, %v88
    %v376 = vld [vmem:[#allocation7] sm:$0xff]
    %v377 = vld [vmem:[#allocation7 + $0x8] sm:$0xff]
    %v378 = vld [vmem:[#allocation7 + $0x10] sm:$0xff]
    %v379 = vld [vmem:[#allocation7 + $0x18] sm:$0xff]
    %v380 = vld [vmem:[#allocation7 + $0x20] sm:$0xff]
    %v381 = vld [vmem:[#allocation7 + $0x28] sm:$0xff]
    %v382 = vld [vmem:[#allocation7 + $0x30] sm:$0xff]
    %v383 = vld [vmem:[#allocation7 + $0x38] sm:$0xff]
    %v384 = vld [vmem:[#allocation7 + $0x40] sm:$0xff]
    %v385 = vld [vmem:[#allocation7 + $0x48] sm:$0xff]
    %v386 = vld [vmem:[#allocation7 + $0x50] sm:$0xff]
    %v387 = vld [vmem:[#allocation7 + $0x58] sm:$0xff]
    %v388 = vld [vmem:[#allocation7 + $0x60] sm:$0xff]
    %v389 = vld [vmem:[#allocation7 + $0x68] sm:$0xff]
    %v390 = vld [vmem:[#allocation7 + $0x70] sm:$0xff]
    %v391 = vld [vmem:[#allocation7 + $0x78] sm:$0xff]
    %392 = vmatprep.subr.mxu0 0.0
    %393 = vmatpush1.msra.mxu0 %v391
    %394 = vmatprep.subr.mxu0 0.0
    %395 = vmatpush1.msra.mxu0 %v390
    %396 = vmatprep.subr.mxu0 0.0
    %397 = vmatpush1.msra.mxu0 %v389
    %398 = vmatprep.subr.mxu0 0.0
    %399 = vmatpush1.msra.mxu0 %v388
    %400 = vmatprep.subr.mxu0 0.0
    %401 = vmatpush1.msra.mxu0 %v387
    %402 = vmatprep.subr.mxu0 0.0
    %403 = vmatpush1.msra.mxu0 %v386
    %404 = vmatprep.subr.mxu0 0.0
    %405 = vmatpush1.msra.mxu0 %v385
    %406 = vmatprep.subr.mxu0 0.0
    %407 = vmatpush1.msra.mxu0 %v384
    %408 = vmatprep.subr.mxu0 0.0
    %409 = vmatpush1.msra.mxu0 %v383
    %410 = vmatprep.subr.mxu0 0.0
    %411 = vmatpush1.msra.mxu0 %v382
    %412 = vmatprep.subr.mxu0 0.0
    %413 = vmatpush1.msra.mxu0 %v381
    %414 = vmatprep.subr.mxu0 0.0
    %415 = vmatpush1.msra.mxu0 %v380
    %416 = vmatprep.subr.mxu0 0.0
    %417 = vmatpush1.msra.mxu0 %v379
    %418 = vmatprep.subr.mxu0 0.0
    %419 = vmatpush1.msra.mxu0 %v378
    %420 = vmatprep.subr.mxu0 0.0
    %421 = vmatpush1.msra.mxu0 %v377
    %422 = vmatprep.subr.mxu0 0.0
    %423 = vmatpush1.msra.mxu0 %v376
    %424 = vmatprep.subr.mxu0 0.0
    %425 = vmatpush2.msra.mxu0 0.0
    %426 = vmatprep.subr.mxu0 0.0
    %427 = vmatpush2.msra.mxu0 0.0
    %428 = vmatprep.subr.mxu0 0.0
    %429 = vmatpush2.msra.mxu0 0.0
    %430 = vmatprep.subr.mxu0 0.0
    %431 = vmatpush2.msra.mxu0 0.0
    %432 = vmatprep.subr.mxu0 0.0
    %433 = vmatpush2.msra.mxu0 0.0
    %434 = vmatprep.subr.mxu0 0.0
    %435 = vmatpush2.msra.mxu0 0.0
    %436 = vmatprep.subr.mxu0 0.0
    %437 = vmatpush2.msra.mxu0 0.0
    %438 = vmatprep.subr.mxu0 0.0
    %439 = vmatpush2.msra.mxu0 0.0
    %440 = vmatprep.subr.mxu0 0.0
    %441 = vmatpush2.msra.mxu0 0.0
    %442 = vmatprep.subr.mxu0 0.0
    %443 = vmatpush2.msra.mxu0 0.0
    %444 = vmatprep.subr.mxu0 0.0
    %445 = vmatpush2.msra.mxu0 0.0
    %446 = vmatprep.subr.mxu0 0.0
    %447 = vmatpush2.msra.mxu0 0.0
    %448 = vmatprep.subr.mxu0 0.0
    %449 = vmatpush2.msra.mxu0 0.0
    %450 = vmatprep.subr.mxu0 0.0
    %451 = vmatpush2.msra.mxu0 0.0
    %452 = vmatprep.subr.mxu0 0.0
    %453 = vmatpush2.msra.mxu0 0.0
    %454 = vmatprep.subr.mxu0 0.0
    %455 = vmatpush2.msra.mxu0 0.0
    %456 = vmatprep.mubr.f32.mxu0 0.0
    %457 = vmatmul.mubr.f32.gmra.mxu0 %v375
    %v458 = vpop.f32.mrf.mxu0
    %v459 = vadd.f32 %v255, %v458
    %v460 = vpop.f32.mrf.mxu0
    %461 = vdwg.mxu0
    %v462 = vtanh.pop %v459
    %v463 = vsub.f32 %v462, %v88
    %v464 = vmul.f32 %v367, %v463
    %v465 = vadd.f32 %v88, %v464
    %v466 = vld [vmem:[#allocation8] sm:$0xff]
    %v467 = vld [vmem:[#allocation8 + $0x8] sm:$0xff]
    %v468 = vld [vmem:[#allocation8 + $0x10] sm:$0xff]
    %v469 = vld [vmem:[#allocation8 + $0x18] sm:$0xff]
    %v470 = vld [vmem:[#allocation8 + $0x20] sm:$0xff]
    %v471 = vld [vmem:[#allocation8 + $0x28] sm:$0xff]
    %v472 = vld [vmem:[#allocation8 + $0x30] sm:$0xff]
    %v473 = vld [vmem:[#allocation8 + $0x38] sm:$0xff]
    %v474 = vld [vmem:[#allocation8 + $0x40] sm:$0xff]
    %v475 = vld [vmem:[#allocation8 + $0x48] sm:$0xff]
    %v476 = vld [vmem:[#allocation8 + $0x50] sm:$0xff]
    %v477 = vld [vmem:[#allocation8 + $0x58] sm:$0xff]
    %v478 = vld [vmem:[#allocation8 + $0x60] sm:$0xff]
    %v479 = vld [vmem:[#allocation8 + $0x68] sm:$0xff]
    %v480 = vld [vmem:[#allocation8 + $0x70] sm:$0xff]
    %v481 = vld [vmem:[#allocation8 + $0x78] sm:$0xff]
    %v482 = vld [vmem:[%s7] sm:$0x1]
    %v484 = vlaneseq
    %v485 = vshrl.u32 %v484, 7
    %v486 = vsub.s32 0, %v485
    %v487 = vrot.slane %v482, %v486
    %489 = vmatprep.subr.mxu0 0.0
    %490 = vmatpush1.msra.mxu0 %v481
    %491 = vmatprep.subr.mxu0 0.0
    %492 = vmatpush1.msra.mxu0 %v480
    %493 = vmatprep.subr.mxu0 0.0
    %494 = vmatpush1.msra.mxu0 %v479
    %495 = vmatprep.subr.mxu0 0.0
    %496 = vmatpush1.msra.mxu0 %v478
    %497 = vmatprep.subr.mxu0 0.0
    %498 = vmatpush1.msra.mxu0 %v477
    %499 = vmatprep.subr.mxu0 0.0
    %500 = vmatpush1.msra.mxu0 %v476
    %501 = vmatprep.subr.mxu0 0.0
    %502 = vmatpush1.msra.mxu0 %v475
    %503 = vmatprep.subr.mxu0 0.0
    %504 = vmatpush1.msra.mxu0 %v474
    %505 = vmatprep.subr.mxu0 0.0
    %506 = vmatpush1.msra.mxu0 %v473
    %507 = vmatprep.subr.mxu0 0.0
    %508 = vmatpush1.msra.mxu0 %v472
    %509 = vmatprep.subr.mxu0 0.0
    %510 = vmatpush1.msra.mxu0 %v471
    %511 = vmatprep.subr.mxu0 0.0
    %512 = vmatpush1.msra.mxu0 %v470
    %513 = vmatprep.subr.mxu0 0.0
    %514 = vmatpush1.msra.mxu0 %v469
    %515 = vmatprep.subr.mxu0 0.0
    %516 = vmatpush1.msra.mxu0 %v468
    %517 = vmatprep.subr.mxu0 0.0
    %518 = vmatpush1.msra.mxu0 %v467
    %519 = vmatprep.subr.mxu0 0.0
    %520 = vmatpush1.msra.mxu0 %v466
    %521 = vmatprep.subr.mxu0 0.0
    %522 = vmatpush2.msra.mxu0 0.0
    %523 = vmatprep.subr.mxu0 0.0
    %524 = vmatpush2.msra.mxu0 0.0
    %525 = vmatprep.subr.mxu0 0.0
    %526 = vmatpush2.msra.mxu0 0.0
    %527 = vmatprep.subr.mxu0 0.0
    %528 = vmatpush2.msra.mxu0 0.0
    %529 = vmatprep.subr.mxu0 0.0
    %530 = vmatpush2.msra.mxu0 0.0
    %531 = vmatprep.subr.mxu0 0.0
    %532 = vmatpush2.msra.mxu0 0.0
    %533 = vmatprep.subr.mxu0 0.0
    %534 = vmatpush2.msra.mxu0 0.0
    %535 = vmatprep.subr.mxu0 0.0
    %536 = vmatpush2.msra.mxu0 0.0
    %537 = vmatprep.subr.mxu0 0.0
    %538 = vmatpush2.msra.mxu0 0.0
    %539 = vmatprep.subr.mxu0 0.0
    %540 = vmatpush2.msra.mxu0 0.0
    %541 = vmatprep.subr.mxu0 0.0
    %542 = vmatpush2.msra.mxu0 0.0
    %543 = vmatprep.subr.mxu0 0.0
    %544 = vmatpush2.msra.mxu0 0.0
    %545 = vmatprep.subr.mxu0 0.0
    %546 = vmatpush2.msra.mxu0 0.0
    %547 = vmatprep.subr.mxu0 0.0
    %548 = vmatpush2.msra.mxu0 0.0
    %549 = vmatprep.subr.mxu0 0.0
    %550 = vmatpush2.msra.mxu0 0.0
    %551 = vmatprep.subr.mxu0 0.0
    %552 = vmatpush2.msra.mxu0 0.0
    %553 = vmatprep.mubr.f32.mxu0 0.0
    %554 = vmatmul.mubr.f32.gmra.mxu0 %v465
    %v555 = vpop.f32.mrf.mxu0
    %v556 = vadd.f32 %v487, %v555
    %v557 = vpop.f32.mrf.mxu0
    %558 = vdwg.mxu0
    %559 = vst [vmem:[#allocation10] sm:$0xff] %v556
    %560 = vst [vmem:[#allocation11] sm:$0xff] %v465
    // Predicated region
    $region50: #{gru_cell_forward.1} parent=1 // pred_check
      _
    $region51: #{gru_cell_forward.1} parent=1 // pred_check_branch
      %562 = sbr.rel (0) target = $region53
    $region52: #{gru_cell_forward.1} parent=1 // pred_region
      %s564 = ssub.s32 128, 128
      %565 = vsyncadd [#allocation4], %s564
      %s567 = sshll.u32 [#allocation10], 4
      %s568 = int_to_ptr.vmem [resolvable:$true] %s567
      %570 = dma.vmem_to_hbm [thread:$0]  %s568, 128, %s8, [#allocation4]
    $region53: #{gru_cell_forward.1} parent=1 // pred_fallthru
      _
    // Predicated region
    $region54: #{gru_cell_forward.1} parent=1 // pred_check
      _
    $region55: #{gru_cell_forward.1} parent=1 // pred_check_branch
      %572 = sbr.rel (0) target = $region57
    $region56: #{gru_cell_forward.1} parent=1 // pred_region
      %s574 = ssub.s32 128, 128
      %575 = vsyncadd [#allocation12], %s574
      %s577 = sshll.u32 [#allocation11], 4
      %s578 = int_to_ptr.vmem [resolvable:$true] %s577
      %580 = dma.vmem_to_hbm [thread:$0]  %s578, 128, %s9, [#allocation12]
    $region57: #{gru_cell_forward.1} parent=1 // pred_fallthru
      _
    // Predicated region
    $region58: #{gru_cell_forward.1} parent=1 // pred_check
      _
    $region59: #{gru_cell_forward.1} parent=1 // pred_check_branch
      %582 = sbr.rel (0) target = $region61
    $region60: #{gru_cell_forward.1} parent=1 // pred_region
      %583 = dma.done [#allocation4], 128
    $region61: #{gru_cell_forward.1} parent=1 // pred_fallthru
      _
    // Predicated region
    $region62: #{gru_cell_forward.1} parent=1 // pred_check
      _
    $region63: #{gru_cell_forward.1} parent=1 // pred_check_branch
      %585 = sbr.rel (0) target = $region65
    $region64: #{gru_cell_forward.1} parent=1 // pred_region
      %586 = dma.done [#allocation12], 128
    $region65: #{gru_cell_forward.1} parent=1 // pred_fallthru
      _
    %587 = vsyncpa [#allocation3], 1
    %588 = vsyncpa [#allocation6], 1
    %589 = vsyncpa [#allocation9], 1
    %590 = vsyncpa [#allocation4], 1
    %591 = vsyncpa [#allocation12], 1

</llo_original>
